<compile_context>
chip_gen: v6e
topology: v6e:2x2x1
jax: 0.10.0
libtpu: 0.0.40
codegen_flags: <defaults>
</compile_context>

<pallas_src>
import functools
import numpy as np

import jax
import jax.numpy as jnp
from jax.experimental import pallas as pl
from jax.experimental.pallas import tpu as pltpu


# ----------------------------------------------------------------------------
# activations (mirror `nonlinearities` dict in the PyTorch module)
# ----------------------------------------------------------------------------
ACTIVATIONS = {
    "relu": lambda x: jnp.maximum(x, 0.0),
    "sigmoid": jax.nn.sigmoid,
    "tanh": jnp.tanh,
    "elu": jax.nn.elu,
    "linear": lambda x: x,
    "sin": lambda x: jnp.sin(30.0 * x),
}


# ----------------------------------------------------------------------------
# Single fused Pallas kernel: whole forward as a chain of matmuls.
# The last (largest) weight matrix arrives as a raw HBM ref and is DMA'd into
# VMEM scratch concurrently with the preceding layers' compute.
# ----------------------------------------------------------------------------
def _fused_forward_kernel(*refs, n_layers, act_flags, nl):
    # refs layout:
    #   [x,
    #    W0, b0, ..., W_{L-2}, b_{L-2},      (small layers, VMEM)
    #    b_{L-1},                             (last bias, VMEM)
    #    W_{L-1},                             (last matrix, HBM / pl.ANY)
    #    o_ref,                               (output, VMEM)
    #    w_last_vmem, sem]                    (scratch)
    n_small = n_layers - 1
    x_ref = refs[0]
    params = refs[1:1 + 2 * n_small]
    b_last_ref = refs[1 + 2 * n_small]
    w_last_hbm = refs[2 + 2 * n_small]
    o_ref = refs[3 + 2 * n_small]
    w_last_vmem = refs[4 + 2 * n_small]
    sem = refs[5 + 2 * n_small]

    # Kick off the dominant weight fetch immediately so it overlaps with every
    # preceding matmul (perf review item: hide the ~768 KiB serial prologue).
    cp = pltpu.make_async_copy(w_last_hbm, w_last_vmem, sem)
    cp.start()

    act = ACTIVATIONS[nl]
    h = x_ref[...]

    # Small layers (FC head + fused FC_last@conv0), all operands already in VMEM.
    # NOTE: default dot precision already meets the 1e-4 tolerance at these
    # sizes (verified); see TODO above re: bf16 / explicit precision.
    for i in range(n_small):
        w = params[2 * i][...]
        b = params[2 * i + 1][...]
        h = jnp.dot(h, w, preferred_element_type=jnp.float32) + b
        if act_flags[i]:
            h = act(h)

    # Last, biggest matmul: wait for its weight DMA only now.
    cp.wait()
    h = jnp.dot(h, w_last_vmem[...], preferred_element_type=jnp.float32) + b_last_ref[...]
    if act_flags[n_layers - 1]:
        h = act(h)

    o_ref[...] = h  # (B, Cout*Hs*Ws): last dim multiple of 128 -> lane-dense


def fused_forward(x, mats, biases, act_flags, nl):
    """x: (B, n_features) f32. mats/biases/act_flags define the fused linear chain.
    Returns flat output (B, out_dim)."""
    B = x.shape[0]
    n_layers = len(mats)
    out_dim = int(mats[-1].shape[1])

    # args: x, (W_i, b_i) for all but the last layer, then b_last, then W_last.
    args = [x]
    for w, b in zip(mats[:-1], biases[:-1]):
        args += [w, b]
    args.append(biases[-1])
    args.append(mats[-1])

    kernel = functools.partial(
        _fused_forward_kernel, n_layers=n_layers, act_flags=tuple(act_flags), nl=nl)

    # Advisory cost estimate so XLA can overlap surrounding ops with this
    # tiny latency-bound call.
    flops = 2 * B * sum(int(m.shape[0]) * int(m.shape[1]) for m in mats)
    act_elems = B * sum(int(m.shape[1]) for m, f in zip(mats, act_flags) if f)
    transcendentals = act_elems if nl in ("sigmoid", "tanh", "elu", "sin") else 0
    bytes_accessed = 4 * (int(x.size) + B * out_dim
                          + sum(int(m.size) for m in mats)
                          + sum(int(b.size) for b in biases))

    return pl.pallas_call(
        kernel,
        out_shape=jax.ShapeDtypeStruct((B, out_dim), jnp.float32),
        in_specs=[pl.BlockSpec(memory_space=pltpu.MemorySpace.VMEM)] * (len(args) - 1)
                 + [pl.BlockSpec(memory_space=pl.ANY)],   # last matrix stays in HBM
        out_specs=pl.BlockSpec(memory_space=pltpu.MemorySpace.VMEM),
        scratch_shapes=[
            pltpu.VMEM(tuple(mats[-1].shape), jnp.float32),  # landing buffer for W_last
            pltpu.SemaphoreType.DMA,
        ],
        cost_estimate=pl.CostEstimate(
            flops=flops, transcendentals=transcendentals, bytes_accessed=bytes_accessed),
    )(*args)


# ----------------------------------------------------------------------------
# Init-time dense unroll of ConvTranspose2d (+ output slice) into a matrix
# ----------------------------------------------------------------------------
_MAX_UNROLL_BYTES = 16 * 1024 * 1024  # keep well under v7x's 64 MiB VMEM


def conv_transpose_to_matrix(w, stride, in_hw, out_hw):
    """ConvTranspose2d (no padding, stride s) followed by out[..., :Hs, :Ws]
    expressed as one dense matrix.

    w: (Cin, Cout, K, K) PyTorch ConvTranspose2d weight.
    Returns M of shape (Cin*Hin*Win, Cout*Hs*Ws) such that
      out.reshape(B, Cout*Hs*Ws) == in.reshape(B, Cin*Hin*Win) @ M  (+ bias).
    Flat index order is (c, h, w) on both sides, so consecutive layers chain
    with no transpose.
    """
    cin, cout, k, _ = w.shape
    hin, win = in_hw
    hs, ws = out_hw
    n_bytes = cin * hin * win * cout * hs * ws * 4
    if n_bytes > _MAX_UNROLL_BYTES:
        # TODO(synk): tiled per-layer conv-transpose path for large spatial configs.
        raise NotImplementedError(
            f"dense conv-transpose unroll would be {n_bytes/2**20:.1f} MiB "
            f"(> {_MAX_UNROLL_BYTES/2**20:.0f} MiB VMEM guard)")
    w_np = np.asarray(w, dtype=np.float32)
    m = np.zeros((cin, hin, win, cout, hs, ws), np.float32)
    for kh in range(k):
        for kw in range(k):
            for ih in range(hin):
                oh = ih * stride + kh
                if oh >= hs:
                    continue
                for iw in range(win):
                    ow = iw * stride + kw
                    if ow >= ws:
                        continue
                    m[:, ih, iw, :, oh, ow] += w_np[:, :, kh, kw]
    return jnp.asarray(m.reshape(cin * hin * win, cout * hs * ws))


def conv_bias_to_flat(b, out_hw):
    hs, ws = out_hw
    return jnp.asarray(np.repeat(np.asarray(b, dtype=np.float32), hs * ws)).reshape(1, -1)


# ----------------------------------------------------------------------------
# Shape utilities (mirror the static methods of ConvTransposeNet exactly)
# ----------------------------------------------------------------------------
def conv_transpose_input_shape(output_shape, kernel_size=1, stride=1):
    h, w = output_shape
    if not isinstance(kernel_size, tuple):
        kernel_size = (kernel_size, kernel_size)
    if not isinstance(stride, tuple):
        stride = (stride, stride)
    H = (h - kernel_size[0]) // stride[0] + 1
    W = (w - kernel_size[1]) // stride[1] + 1
    return (H, W)


def get_target_shape(shape, kernel_size, stride):
    if not isinstance(kernel_size, tuple):
        kernel_size = (kernel_size, kernel_size)
    if not isinstance(stride, tuple):
        stride = (stride, stride)
    h, w = shape
    # The original module uses `h` (not `w`) for the W dimension; replicated
    # for fidelity, but fail loudly on non-square configs instead of silently
    # producing wrong shapes.
    assert h == w, f"ConvTransposeNet.get_target_shape only supports square shapes (got {shape})"
    H = int(np.ceil((h - kernel_size[0]) / stride[0])) * stride[0] + kernel_size[0]
    W = int(np.ceil((h - kernel_size[1]) / stride[1])) * stride[1] + kernel_size[1]
    return (H, W)


# ----------------------------------------------------------------------------
# ConvTransposeNet (synthetic deterministic parameters)
# ----------------------------------------------------------------------------
class ConvTransposeNetPallas:
    def __init__(self, output_n_channels, input_n_features, output_image_shape,
                 n_fc_layers, n_fc_units, conv_layer_specs, nl, key):
        self.nl = nl
        self.output_n_channels = output_n_channels
        spatial_shape = tuple(output_image_shape)

        # --- replicate constructor shape bookkeeping (reverse pass) ---
        prev_n_channels = output_n_channels
        shapes_after_slice = [spatial_shape]
        rev_layer_defs = []
        for spec in reversed(conv_layer_specs):
            n_filters = spec["n_filters"]
            k = spec["kernel_size"]
            s = spec.get("stride", 1)
            shape_after_slice = shapes_after_slice[-1]
            target_shape = get_target_shape(shape_after_slice, k, s)
            rev_layer_defs.append(dict(cin=n_filters, cout=prev_n_channels, k=k, stride=s))
            prev_n_channels = n_filters
            new_spatial = conv_transpose_input_shape(target_shape, k, s)
            shapes_after_slice.append(new_spatial)

        self.conv_layer_defs = list(reversed(rev_layer_defs))          # forward order
        self.shapes_after_slice = list(reversed(shapes_after_slice[:-1]))
        self.conv_input_shape = (n_filters, *new_spatial)
        conv_input_size = int(np.prod(self.conv_input_shape))

        # --- deterministic parameter init (synthetic, PyTorch-like scales) ---
        n_keys = 2 * (n_fc_layers + 1) + 2 * len(self.conv_layer_defs)
        keys = jax.random.split(key, n_keys)
        kit = iter(keys)

        # MLP: input_n_features -> [n_fc_units]*n_fc_layers -> conv_input_size
        fc_dims = [input_n_features] + [n_fc_units] * n_fc_layers + [conv_input_size]
        self.fc_weights, self.fc_biases = [], []
        for d_in, d_out in zip(fc_dims[:-1], fc_dims[1:]):
            bound = 1.0 / np.sqrt(d_in)
            w = jax.random.uniform(next(kit), (d_in, d_out), jnp.float32, -bound, bound)
            b = jax.random.uniform(next(kit), (1, d_out), jnp.float32, -bound, bound)
            self.fc_weights.append(w)
            self.fc_biases.append(b)

        # ConvTranspose2d params kept in PyTorch layout: weight (Cin,Cout,K,K), bias (Cout,)
        self.conv_params = []
        for d in self.conv_layer_defs:
            cin, cout, k, s = d["cin"], d["cout"], d["k"], d["stride"]
            bound = 1.0 / np.sqrt(cin * k * k)
            w = jax.random.uniform(next(kit), (cin, cout, k, k), jnp.float32, -bound, bound)
            b = jax.random.uniform(next(kit), (cout,), jnp.float32, -bound, bound)
            self.conv_params.append(dict(w=w, b=b, k=k, stride=s))

        # --- one-time dense unroll of each conv-transpose (+ its slice) ---
        self.conv_mats, self.conv_flat_biases = [], []
        in_hw = self.conv_input_shape[1:]
        for i, p in enumerate(self.conv_params):
            out_hw = self.shapes_after_slice[i]
            self.conv_mats.append(conv_transpose_to_matrix(p["w"], p["stride"], in_hw, out_hw))
            self.conv_flat_biases.append(conv_bias_to_flat(p["b"], out_hw))
            in_hw = out_hw

        # --- build the fused linear chain the kernel executes ---
        # FC layers have an activation after all but the last; conv layers have
        # an activation after all but the last.  There is NO activation between
        # the last FC layer and the first conv matrix, so fold them into one
        # matmul (exact, done in float64 on host).
        mats, biases, act_flags = [], [], []
        n_fc_total = len(self.fc_weights)
        for i in range(n_fc_total - 1):
            mats.append(self.fc_weights[i])
            biases.append(self.fc_biases[i])
            act_flags.append(True)
        n_conv = len(self.conv_mats)
        if n_conv > 0:
            wl = np.asarray(self.fc_weights[-1], np.float64)
            bl = np.asarray(self.fc_biases[-1], np.float64)
            m0 = np.asarray(self.conv_mats[0], np.float64)
            c0 = np.asarray(self.conv_flat_biases[0], np.float64)
            mats.append(jnp.asarray((wl @ m0).astype(np.float32)))
            biases.append(jnp.asarray((bl @ m0 + c0).astype(np.float32)))
            act_flags.append(n_conv > 1)          # conv0 activation iff it is not the last conv
            for j in range(1, n_conv):
                mats.append(self.conv_mats[j])
                biases.append(self.conv_flat_biases[j])
                act_flags.append(j < n_conv - 1)  # no activation after the final conv
        else:
            mats.append(self.fc_weights[-1])
            biases.append(self.fc_biases[-1])
            act_flags.append(False)

        self.layer_mats = mats
        self.layer_biases = biases
        self.layer_act_flags = tuple(act_flags)

    def forward(self, x):
        b = x.shape[0]
        x = x.reshape(b, -1)
        flat = fused_forward(x, self.layer_mats, self.layer_biases,
                             self.layer_act_flags, self.nl)
        hs, ws = self.shapes_after_slice[-1]
        # (B, Cout*Hs*Ws) -> (B, Cout, Hs, Ws): metadata-only reshape (flat
        # index order is already (c, h, w)), so NCHW comes out for free.
        return flat.reshape(b, self.output_n_channels, hs, ws)


# ----------------------------------------------------------------------------
# Pure-JAX reference (UNfused: scatter-based conv transpose on the RAW conv
# weights + separate FC layers) — validates both the dense unroll and the fold.
# ----------------------------------------------------------------------------
def _conv_transpose_ref(x, w, b, s):
    B, Cin, H, W = x.shape
    _, Cout, K, _ = w.shape
    Ho, Wo = (H - 1) * s + K, (W - 1) * s + K
    out = jnp.zeros((B, Cout, Ho, Wo), jnp.float32) + b[None, :, None, None]
    for ih in range(H):
        for iw in range(W):
            contrib = jnp.einsum("bc,cokl->bokl", x[:, :, ih, iw], w)
            out = out.at[:, :, ih * s:ih * s + K, iw * s:iw * s + K].add(contrib)
    return out


def reference_forward(x, net):
    b = x.shape[0]
    h = x.reshape(b, -1)
    nw = len(net.fc_weights)
    for i, (w, bb) in enumerate(zip(net.fc_weights, net.fc_biases)):
        h = h @ w + bb
        if i < nw - 1:
            h = ACTIVATIONS[net.nl](h)
    vol = h.reshape(b, *net.conv_input_shape)
    n = len(net.conv_params)
    for i, p in enumerate(net.conv_params):
        vol = _conv_transpose_ref(vol, p["w"], p["b"], p["stride"])
        hs, ws = net.shapes_after_slice[i]
        vol = vol[..., :hs, :ws]
        if i < n - 1:
            vol = ACTIVATIONS[net.nl](vol)
    return vol


# ----------------------------------------------------------------------------
if __name__ == "__main__":
    root_key = jax.random.PRNGKey(0)
    param_key, data_key = jax.random.split(root_key)

    conv_layer_specs = [
        dict(n_filters=8, kernel_size=3, stride=2),
        dict(n_filters=4, kernel_size=3, stride=2),
    ]
    net = ConvTransposeNetPallas(
        output_n_channels=3,
        input_n_features=32,
        output_image_shape=(16, 16),
        n_fc_layers=2,
        n_fc_units=32,
        conv_layer_specs=conv_layer_specs,
        nl="relu",
        key=param_key,
    )

    x = jax.random.normal(data_key, (2, 32), jnp.float32)

    out = net.forward(x)
    out = jax.block_until_ready(out)

    assert out.shape == (2, 3, 16, 16), out.shape
    ref = reference_forward(x, net)
    np.testing.assert_allclose(np.asarray(out), np.asarray(ref), rtol=1e-4, atol=1e-4)

    print("KERNEL_OK")
</pallas_src>

<mosaic_0001>
module attributes {stable_mosaic.version = 11 : i64} {
  func.func @_fused_forward_kernel(%arg0: memref<2x32xf32, #tpu.memory_space<vmem>>, %arg1: memref<32x32xf32, #tpu.memory_space<vmem>>, %arg2: memref<1x32xf32, #tpu.memory_space<vmem>>, %arg3: memref<32x32xf32, #tpu.memory_space<vmem>>, %arg4: memref<1x32xf32, #tpu.memory_space<vmem>>, %arg5: memref<32x256xf32, #tpu.memory_space<vmem>>, %arg6: memref<1x256xf32, #tpu.memory_space<vmem>>, %arg7: memref<1x768xf32, #tpu.memory_space<vmem>>, %arg8: memref<256x768xf32, #tpu.memory_space<any>>, %arg9: memref<2x768xf32, #tpu.memory_space<vmem>>, %arg10: memref<256x768xf32, #tpu.memory_space<vmem>>, %arg11: memref<!tpu.dma_semaphore, #tpu.memory_space<semaphore_mem>>) attributes {dimension_semantics = [], scalar_prefetch = 0 : i64, scratch_operands = 2 : i64, tpu.core_type = #tpu.core_type<tc>} {
    tpu.enqueue_dma source(%arg8 : memref<256x768xf32, #tpu.memory_space<any>>) target(%arg10 : memref<256x768xf32, #tpu.memory_space<vmem>>) target_semaphore(%arg11 : memref<!tpu.dma_semaphore, #tpu.memory_space<semaphore_mem>>)
    %c0 = arith.constant 0 : index
    %c0_0 = arith.constant 0 : index
    %0 = vector.load %arg0[%c0, %c0_0] : memref<2x32xf32, #tpu.memory_space<vmem>>, vector<2x32xf32>
    %c0_1 = arith.constant 0 : index
    %c0_2 = arith.constant 0 : index
    %1 = vector.load %arg1[%c0_1, %c0_2] : memref<32x32xf32, #tpu.memory_space<vmem>>, vector<32x32xf32>
    %c0_3 = arith.constant 0 : index
    %c0_4 = arith.constant 0 : index
    %2 = vector.load %arg2[%c0_3, %c0_4] : memref<1x32xf32, #tpu.memory_space<vmem>>, vector<1x32xf32>
    %cst = arith.constant dense<0.000000e+00> : vector<2x32xf32>
    %3 = tpu.matmul %0, %1, %cst {dimension_numbers = #tpu.dot_dimension_numbers<[1], [0], [0], [1], [0, 0, 1, 1], [], []>} : vector<2x32xf32>, vector<32x32xf32>, vector<2x32xf32> -> vector<2x32xf32>
    %4 = vector.broadcast %2 : vector<1x32xf32> to vector<2x32xf32>
    %5 = arith.addf %3, %4 : vector<2x32xf32>
    %cst_5 = arith.constant 0.000000e+00 : f32
    %6 = vector.broadcast %cst_5 : f32 to vector<2x32xf32>
    %7 = arith.maximumf %5, %6 : vector<2x32xf32>
    %c0_6 = arith.constant 0 : index
    %c0_7 = arith.constant 0 : index
    %8 = vector.load %arg3[%c0_6, %c0_7] : memref<32x32xf32, #tpu.memory_space<vmem>>, vector<32x32xf32>
    %c0_8 = arith.constant 0 : index
    %c0_9 = arith.constant 0 : index
    %9 = vector.load %arg4[%c0_8, %c0_9] : memref<1x32xf32, #tpu.memory_space<vmem>>, vector<1x32xf32>
    %cst_10 = arith.constant dense<0.000000e+00> : vector<2x32xf32>
    %10 = tpu.matmul %7, %8, %cst_10 {dimension_numbers = #tpu.dot_dimension_numbers<[1], [0], [0], [1], [0, 0, 1, 1], [], []>} : vector<2x32xf32>, vector<32x32xf32>, vector<2x32xf32> -> vector<2x32xf32>
    %11 = vector.broadcast %9 : vector<1x32xf32> to vector<2x32xf32>
    %12 = arith.addf %10, %11 : vector<2x32xf32>
    %cst_11 = arith.constant 0.000000e+00 : f32
    %13 = vector.broadcast %cst_11 : f32 to vector<2x32xf32>
    %14 = arith.maximumf %12, %13 : vector<2x32xf32>
    %c0_12 = arith.constant 0 : index
    %c0_13 = arith.constant 0 : index
    %15 = vector.load %arg5[%c0_12, %c0_13] : memref<32x256xf32, #tpu.memory_space<vmem>>, vector<32x256xf32>
    %c0_14 = arith.constant 0 : index
    %c0_15 = arith.constant 0 : index
    %16 = vector.load %arg6[%c0_14, %c0_15] : memref<1x256xf32, #tpu.memory_space<vmem>>, vector<1x256xf32>
    %cst_16 = arith.constant dense<0.000000e+00> : vector<2x256xf32>
    %17 = tpu.matmul %14, %15, %cst_16 {dimension_numbers = #tpu.dot_dimension_numbers<[1], [0], [0], [1], [0, 0, 1, 1], [], []>} : vector<2x32xf32>, vector<32x256xf32>, vector<2x256xf32> -> vector<2x256xf32>
    %18 = vector.broadcast %16 : vector<1x256xf32> to vector<2x256xf32>
    %19 = arith.addf %17, %18 : vector<2x256xf32>
    %cst_17 = arith.constant 0.000000e+00 : f32
    %20 = vector.broadcast %cst_17 : f32 to vector<2x256xf32>
    %21 = arith.maximumf %19, %20 : vector<2x256xf32>
    tpu.wait_dma2 semaphore(%arg11 : memref<!tpu.dma_semaphore, #tpu.memory_space<semaphore_mem>>) src(%arg8 : memref<256x768xf32, #tpu.memory_space<any>>) dst(%arg10 : memref<256x768xf32, #tpu.memory_space<vmem>>)
    %c0_18 = arith.constant 0 : index
    %c0_19 = arith.constant 0 : index
    %22 = vector.load %arg10[%c0_18, %c0_19] : memref<256x768xf32, #tpu.memory_space<vmem>>, vector<256x768xf32>
    %cst_20 = arith.constant dense<0.000000e+00> : vector<2x768xf32>
    %23 = tpu.matmul %21, %22, %cst_20 {dimension_numbers = #tpu.dot_dimension_numbers<[1], [0], [0], [1], [0, 0, 1, 1], [], []>} : vector<2x256xf32>, vector<256x768xf32>, vector<2x768xf32> -> vector<2x768xf32>
    %c0_21 = arith.constant 0 : index
    %c0_22 = arith.constant 0 : index
    %24 = vector.load %arg7[%c0_21, %c0_22] : memref<1x768xf32, #tpu.memory_space<vmem>>, vector<1x768xf32>
    %25 = vector.broadcast %24 : vector<1x768xf32> to vector<2x768xf32>
    %26 = arith.addf %23, %25 : vector<2x768xf32>
    %c0_23 = arith.constant 0 : index
    %c0_24 = arith.constant 0 : index
    %27 = vector.load %arg9[%c0_23, %c0_24] : memref<2x768xf32, #tpu.memory_space<vmem>>, vector<2x768xf32>
    tpu.vector_store %arg9[%c0_23, %c0_24], %26 {strides = array<i32>} : memref<2x768xf32, #tpu.memory_space<vmem>>, vector<2x768xf32>,
    return
  }
}

</mosaic_0001>

<llo_original>
// kernel: tpu_custom_call.1
$region0: #{tpu_custom_call.1}
  #allocation0 [shape = 'u32[]', space=smem, size = 0x4, offset = 0x4, fixed_abs, tag = 'smem constant byte address 0x4 - core index']
  #allocation1 [shape = 'u32[144,128]{1,0:T(1,128)}', space=vmem, size = 0x12000, scoped, tag = 'internal scratch']
  #allocation2 [shape = 'f32[256,768]{1,0:T(8,128)}', space=vmem, size = 0xc0000, scoped, tag = 'scratch operand']
  #allocation3 [shape = 's32[1]{0}', space=sflag, size = 0x4, scoped, tag = 'scratch operand']
  #allocation13 [shape = 's32[]', space=sflag, size = 0x4, offset = 0, fixed_abs, tag = 'sflag constant byte address 0x0 - dummy sync flag']
  #allocation14 [shape = 's32[]', space=sflag, size = 0x4, offset = 0, fixed_abs, tag = 'sflag constant byte address 0x0 - dummy sync flag']
  #allocation15 [shape = 'u32[]', space=smem, size = 0x4, offset = 0x44, fixed_abs, tag = 'smem constant byte address 0x44 - assertion arg 0']
  #allocation16 [shape = 'u32[]', space=smem, size = 0x4, offset = 0x48, fixed_abs, tag = 'smem constant byte address 0x48 - assertion arg 1']
  %s0 = inlined_call_operand.hbm [shape: f32[2,32], index: 0, kind: input, shape index: {}]
  %s1 = inlined_call_operand.hbm [shape: f32[32,32], index: 1, kind: input, shape index: {}]
  %s2 = inlined_call_operand.vmem [shape: f32[1,32], index: 2, kind: input, shape index: {}]
  %s3 = inlined_call_operand.hbm [shape: f32[32,32], index: 3, kind: input, shape index: {}]
  %s4 = inlined_call_operand.vmem [shape: f32[1,32], index: 4, kind: input, shape index: {}]
  %s5 = inlined_call_operand.hbm [shape: f32[32,256], index: 5, kind: input, shape index: {}]
  %s6 = inlined_call_operand.vmem [shape: f32[1,256], index: 6, kind: input, shape index: {}]
  %s7 = inlined_call_operand.vmem [shape: f32[1,768], index: 7, kind: input, shape index: {}]
  %s8 = inlined_call_operand.hbm [shape: f32[256,768], index: 8, kind: input, shape index: {}]
  %s9 = inlined_call_operand.hbm [shape: f32[2,768], index: 9, kind: output, shape index: {}]
  %s10 = sld [smem:[#allocation0]]
  $region62: #{tpu_custom_call.1} parent=0
    _
  %s12 = ssub.s32 1, %s10
  %s13 = scalar_select 0, %s12, %s10
  $region1: #{tpu_custom_call.1} parent=0
    #allocation4 [shape = 'u8[1024]{0}', space=vmem, size = 0x400, scoped, tag = 'input window, operand 0, single buffered']
    #allocation5 [shape = 's32[1]{0}', space=sflag, size = 0x4, scoped, tag = 'scoped memory for tpu_custom_call.1']
    #allocation6 [shape = 's32[1]{0}', space=sflag, size = 0x4, scoped, tag = 'scoped memory for tpu_custom_call.1']
    #allocation7 [shape = 'u8[16384]{0}', space=vmem, size = 0x4000, scoped, tag = 'input window, operand 1, single buffered']
    #allocation8 [shape = 's32[1]{0}', space=sflag, size = 0x4, scoped, tag = 'scoped memory for tpu_custom_call.1']
    #allocation9 [shape = 'u8[16384]{0}', space=vmem, size = 0x4000, scoped, tag = 'input window, operand 3, single buffered']
    #allocation10 [shape = 'u8[32768]{0}', space=vmem, size = 0x8000, scoped, tag = 'input window, operand 5, single buffered']
    #allocation11 [shape = 's32[1]{0}', space=sflag, size = 0x4, scoped, tag = 'scoped memory for tpu_custom_call.1']
    #allocation12 [shape = 'u8[6144]{0}', space=vmem, size = 0x1800, scoped, tag = 'output window, operand 0, single buffered']
    %14 = vsyncpa [#allocation5], 0
    %15 = vsyncpa [#allocation8], 0
    %16 = vsyncpa [#allocation11], 0
    %17 = vsyncpa [#allocation6], 0
    // Predicated region
    $region2: #{tpu_custom_call.1} parent=1 // pred_check
      _
    $region3: #{tpu_custom_call.1} parent=1 // pred_check_branch
      %19 = sbr.rel (0) target = $region5
    $region4: #{tpu_custom_call.1} parent=1 // pred_region
      %s21 = ssub.s32 32, 32
      %22 = vsyncadd [#allocation5], %s21
      %s24 = sshll.u32 [#allocation4], 4
      %s25 = int_to_ptr.vmem [resolvable:$true] %s24
      %27 = dma.hbm_to_vmem [thread:$0]  %s0, 32, %s25, [#allocation5]
    $region5: #{tpu_custom_call.1} parent=1 // pred_fallthru
      _
    // Predicated region
    $region6: #{tpu_custom_call.1} parent=1 // pred_check
      _
    $region7: #{tpu_custom_call.1} parent=1 // pred_check_branch
      %29 = sbr.rel (0) target = $region9
    $region8: #{tpu_custom_call.1} parent=1 // pred_region
      %s31 = ssub.s32 512, 512
      %32 = vsyncadd [#allocation8], %s31
      %s33 = sshll.u32 [#allocation7], 4
      %s34 = int_to_ptr.vmem [resolvable:$true] %s33
      %39 = dma.hbm_to_vmem [thread:$0]  %s1, 512, %s34, [#allocation8], 128, 128, 8
    $region9: #{tpu_custom_call.1} parent=1 // pred_fallthru
      _
    // Predicated region
    $region10: #{tpu_custom_call.1} parent=1 // pred_check
      _
    $region11: #{tpu_custom_call.1} parent=1 // pred_check_branch
      %41 = sbr.rel (0) target = $region13
    $region12: #{tpu_custom_call.1} parent=1 // pred_region
      _
    $region13: #{tpu_custom_call.1} parent=1 // pred_fallthru
      _
    // Predicated region
    $region14: #{tpu_custom_call.1} parent=1 // pred_check
      _
    $region15: #{tpu_custom_call.1} parent=1 // pred_check_branch
      %43 = sbr.rel (0) target = $region17
    $region16: #{tpu_custom_call.1} parent=1 // pred_region
      %s45 = ssub.s32 512, 512
      %46 = vsyncadd [#allocation8], %s45
      %s47 = sshll.u32 [#allocation9], 4
      %s48 = int_to_ptr.vmem [resolvable:$true] %s47
      %53 = dma.hbm_to_vmem [thread:$0]  %s3, 512, %s48, [#allocation8], 128, 128, 8
    $region17: #{tpu_custom_call.1} parent=1 // pred_fallthru
      _
    // Predicated region
    $region18: #{tpu_custom_call.1} parent=1 // pred_check
      _
    $region19: #{tpu_custom_call.1} parent=1 // pred_check_branch
      %55 = sbr.rel (0) target = $region21
    $region20: #{tpu_custom_call.1} parent=1 // pred_region
      _
    $region21: #{tpu_custom_call.1} parent=1 // pred_fallthru
      _
    // Predicated region
    $region22: #{tpu_custom_call.1} parent=1 // pred_check
      _
    $region23: #{tpu_custom_call.1} parent=1 // pred_check_branch
      %57 = sbr.rel (0) target = $region25
    $region24: #{tpu_custom_call.1} parent=1 // pred_region
      %s59 = ssub.s32 1024, 1024
      %60 = vsyncadd [#allocation11], %s59
      %s61 = sshll.u32 [#allocation10], 4
      %s62 = int_to_ptr.vmem [resolvable:$true] %s61
      %67 = dma.hbm_to_vmem [thread:$0]  %s5, 1024, %s62, [#allocation11], 256, 256, 16
    $region25: #{tpu_custom_call.1} parent=1 // pred_fallthru
      _
    // Predicated region
    $region26: #{tpu_custom_call.1} parent=1 // pred_check
      _
    $region27: #{tpu_custom_call.1} parent=1 // pred_check_branch
      %69 = sbr.rel (0) target = $region29
    $region28: #{tpu_custom_call.1} parent=1 // pred_region
      _
    $region29: #{tpu_custom_call.1} parent=1 // pred_fallthru
      _
    // Predicated region
    $region30: #{tpu_custom_call.1} parent=1 // pred_check
      _
    $region31: #{tpu_custom_call.1} parent=1 // pred_check_branch
      %71 = sbr.rel (0) target = $region33
    $region32: #{tpu_custom_call.1} parent=1 // pred_region
      _
    $region33: #{tpu_custom_call.1} parent=1 // pred_fallthru
      _
    // Predicated region
    $region34: #{tpu_custom_call.1} parent=1 // pred_check
      _
    $region35: #{tpu_custom_call.1} parent=1 // pred_check_branch
      %73 = sbr.rel (0) target = $region37
    $region36: #{tpu_custom_call.1} parent=1 // pred_region
      %74 = dma.done [#allocation5], 32
    $region37: #{tpu_custom_call.1} parent=1 // pred_fallthru
      _
    // Predicated region
    $region38: #{tpu_custom_call.1} parent=1 // pred_check
      _
    $region39: #{tpu_custom_call.1} parent=1 // pred_check_branch
      %76 = sbr.rel (0) target = $region41
    $region40: #{tpu_custom_call.1} parent=1 // pred_region
      %77 = dma.done [#allocation8], 512
    $region41: #{tpu_custom_call.1} parent=1 // pred_fallthru
      _
    // Predicated region
    $region42: #{tpu_custom_call.1} parent=1 // pred_check
      _
    $region43: #{tpu_custom_call.1} parent=1 // pred_check_branch
      %79 = sbr.rel (0) target = $region45
    $region44: #{tpu_custom_call.1} parent=1 // pred_region
      %80 = dma.done [#allocation8], 512
    $region45: #{tpu_custom_call.1} parent=1 // pred_fallthru
      _
    // Predicated region
    $region46: #{tpu_custom_call.1} parent=1 // pred_check
      _
    $region47: #{tpu_custom_call.1} parent=1 // pred_check_branch
      %82 = sbr.rel (0) target = $region49
    $region48: #{tpu_custom_call.1} parent=1 // pred_region
      %83 = dma.done [#allocation11], 1024
    $region49: #{tpu_custom_call.1} parent=1 // pred_fallthru
      _
    // Predicated region
    $region50: #{tpu_custom_call.1} parent=1 // pred_check
      _
    $region51: #{tpu_custom_call.1} parent=1 // pred_check_branch
      %85 = sbr.rel target = $region53
    $region52: #{tpu_custom_call.1} parent=1 // pred_region
      %86 = sst [smem:[#allocation15]] [#allocation14]
      %87 = sst [smem:[#allocation16]] [#allocation13]
    $region53: #{tpu_custom_call.1} parent=1 // pred_fallthru
      _
    %89 = shalt.err (0)
    %s91 = sshll.u32 [#allocation2], 4
    %s92 = int_to_ptr.vmem [resolvable:$true] %s91
    %94 = dma.hbm_to_vmem [thread:$0]  %s8, 24576, %s92, [#allocation3]
    %v95 = vld [vmem:[#allocation4] sm:$0x3]
    %v96 = vld [vmem:[#allocation7] sm:$0xff]
    %v97 = vld [vmem:[#allocation7 + $0x8] sm:$0xff]
    %v98 = vld [vmem:[#allocation7 + $0x10] sm:$0xff]
    %v99 = vld [vmem:[#allocation7 + $0x18] sm:$0xff]
    %v100 = vld [vmem:[%s2] sm:$0x1]
    %v102 = vlaneseq
    %v103 = vshrl.u32 %v102, 7
    %v104 = vsub.s32 0, %v103
    %v105 = vrot.slane %v100, %v104
    %vm107 = vcmask 261120
    %v109 = vsel %vm107, %v95, 0
    %111 = vmatprep.subr.mxu0 0.0
    %112 = vmatpush1.msra.mxu0 0.0
    %113 = vmatprep.subr.mxu0 0.0
    %114 = vmatpush1.msra.mxu0 0.0
    %115 = vmatprep.subr.mxu0 0.0
    %116 = vmatpush1.msra.mxu0 0.0
    %117 = vmatprep.subr.mxu0 0.0
    %118 = vmatpush1.msra.mxu0 0.0
    %119 = vmatprep.subr.mxu0 0.0
    %120 = vmatpush1.msra.mxu0 0.0
    %121 = vmatprep.subr.mxu0 0.0
    %122 = vmatpush1.msra.mxu0 0.0
    %123 = vmatprep.subr.mxu0 0.0
    %124 = vmatpush1.msra.mxu0 0.0
    %125 = vmatprep.subr.mxu0 0.0
    %126 = vmatpush1.msra.mxu0 0.0
    %127 = vmatprep.subr.mxu0 0.0
    %128 = vmatpush1.msra.mxu0 0.0
    %129 = vmatprep.subr.mxu0 0.0
    %130 = vmatpush1.msra.mxu0 0.0
    %131 = vmatprep.subr.mxu0 0.0
    %132 = vmatpush1.msra.mxu0 0.0
    %133 = vmatprep.subr.mxu0 0.0
    %134 = vmatpush1.msra.mxu0 0.0
    %135 = vmatprep.subr.mxu0 0.0
    %136 = vmatpush1.msra.mxu0 %v99
    %137 = vmatprep.subr.mxu0 0.0
    %138 = vmatpush1.msra.mxu0 %v98
    %139 = vmatprep.subr.mxu0 0.0
    %140 = vmatpush1.msra.mxu0 %v97
    %141 = vmatprep.subr.mxu0 0.0
    %142 = vmatpush1.msra.mxu0 %v96
    %143 = vmatprep.subr.mxu0 0.0
    %144 = vmatpush2.msra.mxu0 0.0
    %145 = vmatprep.subr.mxu0 0.0
    %146 = vmatpush2.msra.mxu0 0.0
    %147 = vmatprep.subr.mxu0 0.0
    %148 = vmatpush2.msra.mxu0 0.0
    %149 = vmatprep.subr.mxu0 0.0
    %150 = vmatpush2.msra.mxu0 0.0
    %151 = vmatprep.subr.mxu0 0.0
    %152 = vmatpush2.msra.mxu0 0.0
    %153 = vmatprep.subr.mxu0 0.0
    %154 = vmatpush2.msra.mxu0 0.0
    %155 = vmatprep.subr.mxu0 0.0
    %156 = vmatpush2.msra.mxu0 0.0
    %157 = vmatprep.subr.mxu0 0.0
    %158 = vmatpush2.msra.mxu0 0.0
    %159 = vmatprep.subr.mxu0 0.0
    %160 = vmatpush2.msra.mxu0 0.0
    %161 = vmatprep.subr.mxu0 0.0
    %162 = vmatpush2.msra.mxu0 0.0
    %163 = vmatprep.subr.mxu0 0.0
    %164 = vmatpush2.msra.mxu0 0.0
    %165 = vmatprep.subr.mxu0 0.0
    %166 = vmatpush2.msra.mxu0 0.0
    %167 = vmatprep.subr.mxu0 0.0
    %168 = vmatpush2.msra.mxu0 0.0
    %169 = vmatprep.subr.mxu0 0.0
    %170 = vmatpush2.msra.mxu0 0.0
    %171 = vmatprep.subr.mxu0 0.0
    %172 = vmatpush2.msra.mxu0 0.0
    %173 = vmatprep.subr.mxu0 0.0
    %174 = vmatpush2.msra.mxu0 0.0
    %175 = vmatprep.mubr.f32.mxu0 0.0
    %176 = vmatmul.mubr.f32.gmra.mxu0 %v109
    %v177 = vpop.f32.mrf.mxu0
    %v178 = vadd.f32 %v105, %v177
    %v179 = vpop.f32.mrf.mxu0
    %180 = vdwg.mxu0
    %v181 = vmax.f32 %v178, 0.0
    %v182 = vld [vmem:[#allocation9] sm:$0xff]
    %v183 = vld [vmem:[#allocation9 + $0x8] sm:$0xff]
    %v184 = vld [vmem:[#allocation9 + $0x10] sm:$0xff]
    %v185 = vld [vmem:[#allocation9 + $0x18] sm:$0xff]
    %v186 = vld [vmem:[%s4] sm:$0x1]
    %v188 = vlaneseq
    %v189 = vshrl.u32 %v188, 7
    %v190 = vsub.s32 0, %v189
    %v191 = vrot.slane %v186, %v190
    %v194 = vsel %vm107, %v181, 0
    %196 = vmatprep.subr.mxu0 0.0
    %197 = vmatpush1.msra.mxu0 0.0
    %198 = vmatprep.subr.mxu0 0.0
    %199 = vmatpush1.msra.mxu0 0.0
    %200 = vmatprep.subr.mxu0 0.0
    %201 = vmatpush1.msra.mxu0 0.0
    %202 = vmatprep.subr.mxu0 0.0
    %203 = vmatpush1.msra.mxu0 0.0
    %204 = vmatprep.subr.mxu0 0.0
    %205 = vmatpush1.msra.mxu0 0.0
    %206 = vmatprep.subr.mxu0 0.0
    %207 = vmatpush1.msra.mxu0 0.0
    %208 = vmatprep.subr.mxu0 0.0
    %209 = vmatpush1.msra.mxu0 0.0
    %210 = vmatprep.subr.mxu0 0.0
    %211 = vmatpush1.msra.mxu0 0.0
    %212 = vmatprep.subr.mxu0 0.0
    %213 = vmatpush1.msra.mxu0 0.0
    %214 = vmatprep.subr.mxu0 0.0
    %215 = vmatpush1.msra.mxu0 0.0
    %216 = vmatprep.subr.mxu0 0.0
    %217 = vmatpush1.msra.mxu0 0.0
    %218 = vmatprep.subr.mxu0 0.0
    %219 = vmatpush1.msra.mxu0 0.0
    %220 = vmatprep.subr.mxu0 0.0
    %221 = vmatpush1.msra.mxu0 %v185
    %222 = vmatprep.subr.mxu0 0.0
    %223 = vmatpush1.msra.mxu0 %v184
    %224 = vmatprep.subr.mxu0 0.0
    %225 = vmatpush1.msra.mxu0 %v183
    %226 = vmatprep.subr.mxu0 0.0
    %227 = vmatpush1.msra.mxu0 %v182
    %228 = vmatprep.subr.mxu0 0.0
    %229 = vmatpush2.msra.mxu0 0.0
    %230 = vmatprep.subr.mxu0 0.0
    %231 = vmatpush2.msra.mxu0 0.0
    %232 = vmatprep.subr.mxu0 0.0
    %233 = vmatpush2.msra.mxu0 0.0
    %234 = vmatprep.subr.mxu0 0.0
    %235 = vmatpush2.msra.mxu0 0.0
    %236 = vmatprep.subr.mxu0 0.0
    %237 = vmatpush2.msra.mxu0 0.0
    %238 = vmatprep.subr.mxu0 0.0
    %239 = vmatpush2.msra.mxu0 0.0
    %240 = vmatprep.subr.mxu0 0.0
    %241 = vmatpush2.msra.mxu0 0.0
    %242 = vmatprep.subr.mxu0 0.0
    %243 = vmatpush2.msra.mxu0 0.0
    %244 = vmatprep.subr.mxu0 0.0
    %245 = vmatpush2.msra.mxu0 0.0
    %246 = vmatprep.subr.mxu0 0.0
    %247 = vmatpush2.msra.mxu0 0.0
    %248 = vmatprep.subr.mxu0 0.0
    %249 = vmatpush2.msra.mxu0 0.0
    %250 = vmatprep.subr.mxu0 0.0
    %251 = vmatpush2.msra.mxu0 0.0
    %252 = vmatprep.subr.mxu0 0.0
    %253 = vmatpush2.msra.mxu0 0.0
    %254 = vmatprep.subr.mxu0 0.0
    %255 = vmatpush2.msra.mxu0 0.0
    %256 = vmatprep.subr.mxu0 0.0
    %257 = vmatpush2.msra.mxu0 0.0
    %258 = vmatprep.subr.mxu0 0.0
    %259 = vmatpush2.msra.mxu0 0.0
    %260 = vmatprep.mubr.f32.mxu0 0.0
    %261 = vmatmul.mubr.f32.gmra.mxu0 %v194
    %v262 = vpop.f32.mrf.mxu0
    %v263 = vadd.f32 %v191, %v262
    %v264 = vpop.f32.mrf.mxu0
    %265 = vdwg.mxu0
    %v266 = vmax.f32 %v263, 0.0
    %v267 = vld [vmem:[#allocation10] sm:$0xff]
    %v268 = vld [vmem:[#allocation10 + $0x8] sm:$0xff]
    %v269 = vld [vmem:[#allocation10 + $0x10] sm:$0xff]
    %v270 = vld [vmem:[#allocation10 + $0x18] sm:$0xff]
    %v271 = vld [vmem:[#allocation10 + $0x20] sm:$0xff]
    %v272 = vld [vmem:[#allocation10 + $0x28] sm:$0xff]
    %v273 = vld [vmem:[#allocation10 + $0x30] sm:$0xff]
    %v274 = vld [vmem:[#allocation10 + $0x38] sm:$0xff]
    %v275 = vld [vmem:[%s6] sm:$0x3]
    %v277 = vlaneseq
    %v278 = vshrl.u32 %v277, 7
    %v279 = vsub.s32 0, %v278
    %v280 = vrot.slane %v275, %v279
    %v281 = vlaneseq
    %v282 = vshrl.u32 %v281, 7
    %v283 = vsub.s32 1, %v282
    %v284 = vrot.slane %v275, %v283
    %v288 = vsel %vm107, %v266, 0
    %290 = vmatprep.subr.mxu0 0.0
    %291 = vmatpush1.msra.mxu0 0.0
    %292 = vmatprep.subr.mxu0 0.0
    %293 = vmatpush1.msra.mxu0 0.0
    %294 = vmatprep.subr.mxu0 0.0
    %295 = vmatpush1.msra.mxu0 0.0
    %296 = vmatprep.subr.mxu0 0.0
    %297 = vmatpush1.msra.mxu0 0.0
    %298 = vmatprep.subr.mxu0 0.0
    %299 = vmatpush1.msra.mxu0 0.0
    %300 = vmatprep.subr.mxu0 0.0
    %301 = vmatpush1.msra.mxu0 0.0
    %302 = vmatprep.subr.mxu0 0.0
    %303 = vmatpush1.msra.mxu0 0.0
    %304 = vmatprep.subr.mxu0 0.0
    %305 = vmatpush1.msra.mxu0 0.0
    %306 = vmatprep.subr.mxu0 0.0
    %307 = vmatpush1.msra.mxu0 0.0
    %308 = vmatprep.subr.mxu0 0.0
    %309 = vmatpush1.msra.mxu0 0.0
    %310 = vmatprep.subr.mxu0 0.0
    %311 = vmatpush1.msra.mxu0 0.0
    %312 = vmatprep.subr.mxu0 0.0
    %313 = vmatpush1.msra.mxu0 0.0
    %314 = vmatprep.subr.mxu0 %v274
    %315 = vmatpush1.msra.mxu0 %v273
    %316 = vmatprep.subr.mxu0 %v272
    %317 = vmatpush1.msra.mxu0 %v271
    %318 = vmatprep.subr.mxu0 %v270
    %319 = vmatpush1.msra.mxu0 %v269
    %320 = vmatprep.subr.mxu0 %v268
    %321 = vmatpush1.msra.mxu0 %v267
    %322 = vmatprep.subr.mxu0 0.0
    %323 = vmatpush2.msra.mxu0 0.0
    %324 = vmatprep.subr.mxu0 0.0
    %325 = vmatpush2.msra.mxu0 0.0
    %326 = vmatprep.subr.mxu0 0.0
    %327 = vmatpush2.msra.mxu0 0.0
    %328 = vmatprep.subr.mxu0 0.0
    %329 = vmatpush2.msra.mxu0 0.0
    %330 = vmatprep.subr.mxu0 0.0
    %331 = vmatpush2.msra.mxu0 0.0
    %332 = vmatprep.subr.mxu0 0.0
    %333 = vmatpush2.msra.mxu0 0.0
    %334 = vmatprep.subr.mxu0 0.0
    %335 = vmatpush2.msra.mxu0 0.0
    %336 = vmatprep.subr.mxu0 0.0
    %337 = vmatpush2.msra.mxu0 0.0
    %338 = vmatprep.subr.mxu0 0.0
    %339 = vmatpush2.msra.mxu0 0.0
    %340 = vmatprep.subr.mxu0 0.0
    %341 = vmatpush2.msra.mxu0 0.0
    %342 = vmatprep.subr.mxu0 0.0
    %343 = vmatpush2.msra.mxu0 0.0
    %344 = vmatprep.subr.mxu0 0.0
    %345 = vmatpush2.msra.mxu0 0.0
    %346 = vmatprep.subr.mxu0 0.0
    %347 = vmatpush2.msra.mxu0 0.0
    %348 = vmatprep.subr.mxu0 0.0
    %349 = vmatpush2.msra.mxu0 0.0
    %350 = vmatprep.subr.mxu0 0.0
    %351 = vmatpush2.msra.mxu0 0.0
    %352 = vmatprep.subr.mxu0 0.0
    %353 = vmatpush2.msra.mxu0 0.0
    %354 = vmatprep.mubr.f32.mxu0 0.0
    %355 = vmatmul.mubr.f32.gmra.mxu0 %v288
    %v356 = vpop.f32.mrf.mxu0
    %v357 = vadd.f32 %v280, %v356
    %v358 = vpop.f32.mrf.mxu0
    %v359 = vadd.f32 %v284, %v358
    %360 = vdwg.mxu0
    %v361 = vmax.f32 %v357, 0.0
    %v362 = vmax.f32 %v359, 0.0
    %s363 = smul.u32 8, 32
    %s364 = smul.u32 %s363, 6
    %s365 = sshll.u32 %s364, 4
    %366 = dma.done [#allocation3], %s365
    %v367 = vld [vmem:[#allocation2] sm:$0xff]
    %v368 = vld [vmem:[#allocation2 + $0x8] sm:$0xff]
    %v369 = vld [vmem:[#allocation2 + $0x10] sm:$0xff]
    %v370 = vld [vmem:[#allocation2 + $0x18] sm:$0xff]
    %v371 = vld [vmem:[#allocation2 + $0x20] sm:$0xff]
    %v372 = vld [vmem:[#allocation2 + $0x28] sm:$0xff]
    %v373 = vld [vmem:[#allocation2 + $0x30] sm:$0xff]
    %v374 = vld [vmem:[#allocation2 + $0x38] sm:$0xff]
    %v375 = vld [vmem:[#allocation2 + $0x40] sm:$0xff]
    %v376 = vld [vmem:[#allocation2 + $0x48] sm:$0xff]
    %v377 = vld [vmem:[#allocation2 + $0x50] sm:$0xff]
    %v378 = vld [vmem:[#allocation2 + $0x58] sm:$0xff]
    %v379 = vld [vmem:[#allocation2 + $0x60] sm:$0xff]
    %v380 = vld [vmem:[#allocation2 + $0x68] sm:$0xff]
    %v381 = vld [vmem:[#allocation2 + $0x70] sm:$0xff]
    %v382 = vld [vmem:[#allocation2 + $0x78] sm:$0xff]
    %v383 = vld [vmem:[#allocation2 + $0x80] sm:$0xff]
    %v384 = vld [vmem:[#allocation2 + $0x88] sm:$0xff]
    %v385 = vld [vmem:[#allocation2 + $0x90] sm:$0xff]
    %v386 = vld [vmem:[#allocation2 + $0x98] sm:$0xff]
    %v387 = vld [vmem:[#allocation2 + $0xa0] sm:$0xff]
    %v388 = vld [vmem:[#allocation2 + $0xa8] sm:$0xff]
    %v389 = vld [vmem:[#allocation2 + $0xb0] sm:$0xff]
    %v390 = vld [vmem:[#allocation2 + $0xb8] sm:$0xff]
    %v391 = vld [vmem:[#allocation2 + $0xc0] sm:$0xff]
    %v392 = vld [vmem:[#allocation2 + $0xc8] sm:$0xff]
    %v393 = vld [vmem:[#allocation2 + $0xd0] sm:$0xff]
    %v394 = vld [vmem:[#allocation2 + $0xd8] sm:$0xff]
    %v395 = vld [vmem:[#allocation2 + $0xe0] sm:$0xff]
    %v396 = vld [vmem:[#allocation2 + $0xe8] sm:$0xff]
    %v397 = vld [vmem:[#allocation2 + $0xf0] sm:$0xff]
    %v398 = vld [vmem:[#allocation2 + $0xf8] sm:$0xff]
    %v399 = vld [vmem:[#allocation2 + $0x100] sm:$0xff]
    %v400 = vld [vmem:[#allocation2 + $0x108] sm:$0xff]
    %v401 = vld [vmem:[#allocation2 + $0x110] sm:$0xff]
    %v402 = vld [vmem:[#allocation2 + $0x118] sm:$0xff]
    %v403 = vld [vmem:[#allocation2 + $0x120] sm:$0xff]
    %v404 = vld [vmem:[#allocation2 + $0x128] sm:$0xff]
    %v405 = vld [vmem:[#allocation2 + $0x130] sm:$0xff]
    %v406 = vld [vmem:[#allocation2 + $0x138] sm:$0xff]
    %v407 = vld [vmem:[#allocation2 + $0x140] sm:$0xff]
    %v408 = vld [vmem:[#allocation2 + $0x148] sm:$0xff]
    %v409 = vld [vmem:[#allocation2 + $0x150] sm:$0xff]
    %v410 = vld [vmem:[#allocation2 + $0x158] sm:$0xff]
    %v411 = vld [vmem:[#allocation2 + $0x160] sm:$0xff]
    %v412 = vld [vmem:[#allocation2 + $0x168] sm:$0xff]
    %v413 = vld [vmem:[#allocation2 + $0x170] sm:$0xff]
    %v414 = vld [vmem:[#allocation2 + $0x178] sm:$0xff]
    %v415 = vld [vmem:[#allocation2 + $0x180] sm:$0xff]
    %v416 = vld [vmem:[#allocation2 + $0x188] sm:$0xff]
    %v417 = vld [vmem:[#allocation2 + $0x190] sm:$0xff]
    %v418 = vld [vmem:[#allocation2 + $0x198] sm:$0xff]
    %v419 = vld [vmem:[#allocation2 + $0x1a0] sm:$0xff]
    %v420 = vld [vmem:[#allocation2 + $0x1a8] sm:$0xff]
    %v421 = vld [vmem:[#allocation2 + $0x1b0] sm:$0xff]
    %v422 = vld [vmem:[#allocation2 + $0x1b8] sm:$0xff]
    %v423 = vld [vmem:[#allocation2 + $0x1c0] sm:$0xff]
    %v424 = vld [vmem:[#allocation2 + $0x1c8] sm:$0xff]
    %v425 = vld [vmem:[#allocation2 + $0x1d0] sm:$0xff]
    %v426 = vld [vmem:[#allocation2 + $0x1d8] sm:$0xff]
    %v427 = vld [vmem:[#allocation2 + $0x1e0] sm:$0xff]
    %v428 = vld [vmem:[#allocation2 + $0x1e8] sm:$0xff]
    %v429 = vld [vmem:[#allocation2 + $0x1f0] sm:$0xff]
    %v430 = vld [vmem:[#allocation2 + $0x1f8] sm:$0xff]
    %v431 = vld [vmem:[#allocation2 + $0x200] sm:$0xff]
    %v432 = vld [vmem:[#allocation2 + $0x208] sm:$0xff]
    %v433 = vld [vmem:[#allocation2 + $0x210] sm:$0xff]
    %v434 = vld [vmem:[#allocation2 + $0x218] sm:$0xff]
    %v435 = vld [vmem:[#allocation2 + $0x220] sm:$0xff]
    %v436 = vld [vmem:[#allocation2 + $0x228] sm:$0xff]
    %v437 = vld [vmem:[#allocation2 + $0x230] sm:$0xff]
    %v438 = vld [vmem:[#allocation2 + $0x238] sm:$0xff]
    %v439 = vld [vmem:[#allocation2 + $0x240] sm:$0xff]
    %v440 = vld [vmem:[#allocation2 + $0x248] sm:$0xff]
    %v441 = vld [vmem:[#allocation2 + $0x250] sm:$0xff]
    %v442 = vld [vmem:[#allocation2 + $0x258] sm:$0xff]
    %v443 = vld [vmem:[#allocation2 + $0x260] sm:$0xff]
    %v444 = vld [vmem:[#allocation2 + $0x268] sm:$0xff]
    %v445 = vld [vmem:[#allocation2 + $0x270] sm:$0xff]
    %v446 = vld [vmem:[#allocation2 + $0x278] sm:$0xff]
    %v447 = vld [vmem:[#allocation2 + $0x280] sm:$0xff]
    %v448 = vld [vmem:[#allocation2 + $0x288] sm:$0xff]
    %v449 = vld [vmem:[#allocation2 + $0x290] sm:$0xff]
    %v450 = vld [vmem:[#allocation2 + $0x298] sm:$0xff]
    %v451 = vld [vmem:[#allocation2 + $0x2a0] sm:$0xff]
    %v452 = vld [vmem:[#allocation2 + $0x2a8] sm:$0xff]
    %v453 = vld [vmem:[#allocation2 + $0x2b0] sm:$0xff]
    %v454 = vld [vmem:[#allocation2 + $0x2b8] sm:$0xff]
    %v455 = vld [vmem:[#allocation2 + $0x2c0] sm:$0xff]
    %v456 = vld [vmem:[#allocation2 + $0x2c8] sm:$0xff]
    %v457 = vld [vmem:[#allocation2 + $0x2d0] sm:$0xff]
    %v458 = vld [vmem:[#allocation2 + $0x2d8] sm:$0xff]
    %v459 = vld [vmem:[#allocation2 + $0x2e0] sm:$0xff]
    %v460 = vld [vmem:[#allocation2 + $0x2e8] sm:$0xff]
    %v461 = vld [vmem:[#allocation2 + $0x2f0] sm:$0xff]
    %v462 = vld [vmem:[#allocation2 + $0x2f8] sm:$0xff]
    %v463 = vld [vmem:[#allocation2 + $0x300] sm:$0xff]
    %v464 = vld [vmem:[#allocation2 + $0x308] sm:$0xff]
    %v465 = vld [vmem:[#allocation2 + $0x310] sm:$0xff]
    %v466 = vld [vmem:[#allocation2 + $0x318] sm:$0xff]
    %v467 = vld [vmem:[#allocation2 + $0x320] sm:$0xff]
    %v468 = vld [vmem:[#allocation2 + $0x328] sm:$0xff]
    %v469 = vld [vmem:[#allocation2 + $0x330] sm:$0xff]
    %v470 = vld [vmem:[#allocation2 + $0x338] sm:$0xff]
    %v471 = vld [vmem:[#allocation2 + $0x340] sm:$0xff]
    %v472 = vld [vmem:[#allocation2 + $0x348] sm:$0xff]
    %v473 = vld [vmem:[#allocation2 + $0x350] sm:$0xff]
    %v474 = vld [vmem:[#allocation2 + $0x358] sm:$0xff]
    %v475 = vld [vmem:[#allocation2 + $0x360] sm:$0xff]
    %v476 = vld [vmem:[#allocation2 + $0x368] sm:$0xff]
    %v477 = vld [vmem:[#allocation2 + $0x370] sm:$0xff]
    %v478 = vld [vmem:[#allocation2 + $0x378] sm:$0xff]
    %v479 = vld [vmem:[#allocation2 + $0x380] sm:$0xff]
    %v480 = vld [vmem:[#allocation2 + $0x388] sm:$0xff]
    %v481 = vld [vmem:[#allocation2 + $0x390] sm:$0xff]
    %v482 = vld [vmem:[#allocation2 + $0x398] sm:$0xff]
    %v483 = vld [vmem:[#allocation2 + $0x3a0] sm:$0xff]
    %v484 = vld [vmem:[#allocation2 + $0x3a8] sm:$0xff]
    %v485 = vld [vmem:[#allocation2 + $0x3b0] sm:$0xff]
    %v486 = vld [vmem:[#allocation2 + $0x3b8] sm:$0xff]
    %v487 = vld [vmem:[#allocation2 + $0x3c0] sm:$0xff]
    %v488 = vld [vmem:[#allocation2 + $0x3c8] sm:$0xff]
    %v489 = vld [vmem:[#allocation2 + $0x3d0] sm:$0xff]
    %v490 = vld [vmem:[#allocation2 + $0x3d8] sm:$0xff]
    %v491 = vld [vmem:[#allocation2 + $0x3e0] sm:$0xff]
    %v492 = vld [vmem:[#allocation2 + $0x3e8] sm:$0xff]
    %v493 = vld [vmem:[#allocation2 + $0x3f0] sm:$0xff]
    %v494 = vld [vmem:[#allocation2 + $0x3f8] sm:$0xff]
    %v495 = vld [vmem:[#allocation2 + $0x400] sm:$0xff]
    %v496 = vld [vmem:[#allocation2 + $0x408] sm:$0xff]
    %v497 = vld [vmem:[#allocation2 + $0x410] sm:$0xff]
    %v498 = vld [vmem:[#allocation2 + $0x418] sm:$0xff]
    %v499 = vld [vmem:[#allocation2 + $0x420] sm:$0xff]
    %v500 = vld [vmem:[#allocation2 + $0x428] sm:$0xff]
    %v501 = vld [vmem:[#allocation2 + $0x430] sm:$0xff]
    %v502 = vld [vmem:[#allocation2 + $0x438] sm:$0xff]
    %v503 = vld [vmem:[#allocation2 + $0x440] sm:$0xff]
    %v504 = vld [vmem:[#allocation2 + $0x448] sm:$0xff]
    %v505 = vld [vmem:[#allocation2 + $0x450] sm:$0xff]
    %v506 = vld [vmem:[#allocation2 + $0x458] sm:$0xff]
    %v507 = vld [vmem:[#allocation2 + $0x460] sm:$0xff]
    %v508 = vld [vmem:[#allocation2 + $0x468] sm:$0xff]
    %v509 = vld [vmem:[#allocation2 + $0x470] sm:$0xff]
    %v510 = vld [vmem:[#allocation2 + $0x478] sm:$0xff]
    %v511 = vld [vmem:[#allocation2 + $0x480] sm:$0xff]
    %v512 = vld [vmem:[#allocation2 + $0x488] sm:$0xff]
    %v513 = vld [vmem:[#allocation2 + $0x490] sm:$0xff]
    %v514 = vld [vmem:[#allocation2 + $0x498] sm:$0xff]
    %v515 = vld [vmem:[#allocation2 + $0x4a0] sm:$0xff]
    %v516 = vld [vmem:[#allocation2 + $0x4a8] sm:$0xff]
    %v517 = vld [vmem:[#allocation2 + $0x4b0] sm:$0xff]
    %v518 = vld [vmem:[#allocation2 + $0x4b8] sm:$0xff]
    %v519 = vld [vmem:[#allocation2 + $0x4c0] sm:$0xff]
    %v520 = vld [vmem:[#allocation2 + $0x4c8] sm:$0xff]
    %v521 = vld [vmem:[#allocation2 + $0x4d0] sm:$0xff]
    %v522 = vld [vmem:[#allocation2 + $0x4d8] sm:$0xff]
    %v523 = vld [vmem:[#allocation2 + $0x4e0] sm:$0xff]
    %v524 = vld [vmem:[#allocation2 + $0x4e8] sm:$0xff]
    %v525 = vld [vmem:[#allocation2 + $0x4f0] sm:$0xff]
    %v526 = vld [vmem:[#allocation2 + $0x4f8] sm:$0xff]
    %v527 = vld [vmem:[#allocation2 + $0x500] sm:$0xff]
    %v528 = vld [vmem:[#allocation2 + $0x508] sm:$0xff]
    %v529 = vld [vmem:[#allocation2 + $0x510] sm:$0xff]
    %v530 = vld [vmem:[#allocation2 + $0x518] sm:$0xff]
    %v531 = vld [vmem:[#allocation2 + $0x520] sm:$0xff]
    %v532 = vld [vmem:[#allocation2 + $0x528] sm:$0xff]
    %v533 = vld [vmem:[#allocation2 + $0x530] sm:$0xff]
    %v534 = vld [vmem:[#allocation2 + $0x538] sm:$0xff]
    %v535 = vld [vmem:[#allocation2 + $0x540] sm:$0xff]
    %v536 = vld [vmem:[#allocation2 + $0x548] sm:$0xff]
    %v537 = vld [vmem:[#allocation2 + $0x550] sm:$0xff]
    %v538 = vld [vmem:[#allocation2 + $0x558] sm:$0xff]
    %v539 = vld [vmem:[#allocation2 + $0x560] sm:$0xff]
    %v540 = vld [vmem:[#allocation2 + $0x568] sm:$0xff]
    %v541 = vld [vmem:[#allocation2 + $0x570] sm:$0xff]
    %v542 = vld [vmem:[#allocation2 + $0x578] sm:$0xff]
    %v543 = vld [vmem:[#allocation2 + $0x580] sm:$0xff]
    %v544 = vld [vmem:[#allocation2 + $0x588] sm:$0xff]
    %v545 = vld [vmem:[#allocation2 + $0x590] sm:$0xff]
    %v546 = vld [vmem:[#allocation2 + $0x598] sm:$0xff]
    %v547 = vld [vmem:[#allocation2 + $0x5a0] sm:$0xff]
    %v548 = vld [vmem:[#allocation2 + $0x5a8] sm:$0xff]
    %v549 = vld [vmem:[#allocation2 + $0x5b0] sm:$0xff]
    %v550 = vld [vmem:[#allocation2 + $0x5b8] sm:$0xff]
    %v551 = vld [vmem:[#allocation2 + $0x5c0] sm:$0xff]
    %v552 = vld [vmem:[#allocation2 + $0x5c8] sm:$0xff]
    %v553 = vld [vmem:[#allocation2 + $0x5d0] sm:$0xff]
    %v554 = vld [vmem:[#allocation2 + $0x5d8] sm:$0xff]
    %v555 = vld [vmem:[#allocation2 + $0x5e0] sm:$0xff]
    %v556 = vld [vmem:[#allocation2 + $0x5e8] sm:$0xff]
    %v557 = vld [vmem:[#allocation2 + $0x5f0] sm:$0xff]
    %v558 = vld [vmem:[#allocation2 + $0x5f8] sm:$0xff]
    %v559 = vld [vmem:[%s7] sm:$0x3f]
    %v561 = vlaneseq
    %v562 = vshrl.u32 %v561, 7
    %v563 = vsub.s32 0, %v562
    %v564 = vrot.slane %v559, %v563
    %v565 = vlaneseq
    %v566 = vshrl.u32 %v565, 7
    %v567 = vsub.s32 1, %v566
    %v568 = vrot.slane %v559, %v567
    %v569 = vlaneseq
    %v570 = vshrl.u32 %v569, 7
    %v571 = vsub.s32 2, %v570
    %v572 = vrot.slane %v559, %v571
    %v573 = vlaneseq
    %v574 = vshrl.u32 %v573, 7
    %v575 = vsub.s32 3, %v574
    %v576 = vrot.slane %v559, %v575
    %v577 = vlaneseq
    %v578 = vshrl.u32 %v577, 7
    %v579 = vsub.s32 4, %v578
    %v580 = vrot.slane %v559, %v579
    %v581 = vlaneseq
    %v582 = vshrl.u32 %v581, 7
    %v583 = vsub.s32 5, %v582
    %v584 = vrot.slane %v559, %v583
    %591 = vmatprep.subr.mxu0 %v458
    %592 = vmatpush1.msra.mxu0 %v457
    %593 = vmatprep.subr.mxu0 %v452
    %594 = vmatpush1.msra.mxu0 %v451
    %595 = vmatprep.subr.mxu0 %v446
    %596 = vmatpush1.msra.mxu0 %v445
    %597 = vmatprep.subr.mxu0 %v440
    %598 = vmatpush1.msra.mxu0 %v439
    %599 = vmatprep.subr.mxu0 %v434
    %600 = vmatpush1.msra.mxu0 %v433
    %601 = vmatprep.subr.mxu0 %v428
    %602 = vmatpush1.msra.mxu0 %v427
    %603 = vmatprep.subr.mxu0 %v422
    %604 = vmatpush1.msra.mxu0 %v421
    %605 = vmatprep.subr.mxu0 %v416
    %606 = vmatpush1.msra.mxu0 %v415
    %607 = vmatprep.subr.mxu0 %v410
    %608 = vmatpush1.msra.mxu0 %v409
    %609 = vmatprep.subr.mxu0 %v404
    %610 = vmatpush1.msra.mxu0 %v403
    %611 = vmatprep.subr.mxu0 %v398
    %612 = vmatpush1.msra.mxu0 %v397
    %613 = vmatprep.subr.mxu0 %v392
    %614 = vmatpush1.msra.mxu0 %v391
    %615 = vmatprep.subr.mxu0 %v386
    %616 = vmatpush1.msra.mxu0 %v385
    %617 = vmatprep.subr.mxu0 %v380
    %618 = vmatpush1.msra.mxu0 %v379
    %619 = vmatprep.subr.mxu0 %v374
    %620 = vmatpush1.msra.mxu0 %v373
    %621 = vmatprep.subr.mxu0 %v368
    %622 = vmatpush1.msra.mxu0 %v367
    %623 = vmatprep.subr.mxu0 %v554
    %624 = vmatpush2.msra.mxu0 %v553
    %625 = vmatprep.subr.mxu0 %v548
    %626 = vmatpush2.msra.mxu0 %v547
    %627 = vmatprep.subr.mxu0 %v542
    %628 = vmatpush2.msra.mxu0 %v541
    %629 = vmatprep.subr.mxu0 %v536
    %630 = vmatpush2.msra.mxu0 %v535
    %631 = vmatprep.subr.mxu0 %v530
    %632 = vmatpush2.msra.mxu0 %v529
    %633 = vmatprep.subr.mxu0 %v524
    %634 = vmatpush2.msra.mxu0 %v523
    %635 = vmatprep.subr.mxu0 %v518
    %636 = vmatpush2.msra.mxu0 %v517
    %637 = vmatprep.subr.mxu0 %v512
    %638 = vmatpush2.msra.mxu0 %v511
    %639 = vmatprep.subr.mxu0 %v506
    %640 = vmatpush2.msra.mxu0 %v505
    %641 = vmatprep.subr.mxu0 %v500
    %642 = vmatpush2.msra.mxu0 %v499
    %643 = vmatprep.subr.mxu0 %v494
    %644 = vmatpush2.msra.mxu0 %v493
    %645 = vmatprep.subr.mxu0 %v488
    %646 = vmatpush2.msra.mxu0 %v487
    %647 = vmatprep.subr.mxu0 %v482
    %648 = vmatpush2.msra.mxu0 %v481
    %649 = vmatprep.subr.mxu0 %v476
    %650 = vmatpush2.msra.mxu0 %v475
    %651 = vmatprep.subr.mxu0 %v470
    %652 = vmatpush2.msra.mxu0 %v469
    %653 = vmatprep.subr.mxu0 %v464
    %654 = vmatpush2.msra.mxu0 %v463
    %655 = vmatprep.mubr.f32.mxu0 %v362
    %656 = vmatmul.mubr.f32.gmra.mxu0 %v361
    %v657 = vpop.f32.mrf.mxu0
    %v658 = vadd.f32 %v564, %v657
    %v659 = vpop.f32.mrf.mxu0
    %v660 = vadd.f32 %v568, %v659
    %661 = vdwg.mxu0
    %662 = vmatprep.subr.mxu0 %v460
    %663 = vmatpush1.msra.mxu0 %v459
    %664 = vmatprep.subr.mxu0 %v454
    %665 = vmatpush1.msra.mxu0 %v453
    %666 = vmatprep.subr.mxu0 %v448
    %667 = vmatpush1.msra.mxu0 %v447
    %668 = vmatprep.subr.mxu0 %v442
    %669 = vmatpush1.msra.mxu0 %v441
    %670 = vmatprep.subr.mxu0 %v436
    %671 = vmatpush1.msra.mxu0 %v435
    %672 = vmatprep.subr.mxu0 %v430
    %673 = vmatpush1.msra.mxu0 %v429
    %674 = vmatprep.subr.mxu0 %v424
    %675 = vmatpush1.msra.mxu0 %v423
    %676 = vmatprep.subr.mxu0 %v418
    %677 = vmatpush1.msra.mxu0 %v417
    %678 = vmatprep.subr.mxu0 %v412
    %679 = vmatpush1.msra.mxu0 %v411
    %680 = vmatprep.subr.mxu0 %v406
    %681 = vmatpush1.msra.mxu0 %v405
    %682 = vmatprep.subr.mxu0 %v400
    %683 = vmatpush1.msra.mxu0 %v399
    %684 = vmatprep.subr.mxu0 %v394
    %685 = vmatpush1.msra.mxu0 %v393
    %686 = vmatprep.subr.mxu0 %v388
    %687 = vmatpush1.msra.mxu0 %v387
    %688 = vmatprep.subr.mxu0 %v382
    %689 = vmatpush1.msra.mxu0 %v381
    %690 = vmatprep.subr.mxu0 %v376
    %691 = vmatpush1.msra.mxu0 %v375
    %692 = vmatprep.subr.mxu0 %v370
    %693 = vmatpush1.msra.mxu0 %v369
    %694 = vmatprep.subr.mxu0 %v556
    %695 = vmatpush2.msra.mxu0 %v555
    %696 = vmatprep.subr.mxu0 %v550
    %697 = vmatpush2.msra.mxu0 %v549
    %698 = vmatprep.subr.mxu0 %v544
    %699 = vmatpush2.msra.mxu0 %v543
    %700 = vmatprep.subr.mxu0 %v538
    %701 = vmatpush2.msra.mxu0 %v537
    %702 = vmatprep.subr.mxu0 %v532
    %703 = vmatpush2.msra.mxu0 %v531
    %704 = vmatprep.subr.mxu0 %v526
    %705 = vmatpush2.msra.mxu0 %v525
    %706 = vmatprep.subr.mxu0 %v520
    %707 = vmatpush2.msra.mxu0 %v519
    %708 = vmatprep.subr.mxu0 %v514
    %709 = vmatpush2.msra.mxu0 %v513
    %710 = vmatprep.subr.mxu0 %v508
    %711 = vmatpush2.msra.mxu0 %v507
    %712 = vmatprep.subr.mxu0 %v502
    %713 = vmatpush2.msra.mxu0 %v501
    %714 = vmatprep.subr.mxu0 %v496
    %715 = vmatpush2.msra.mxu0 %v495
    %716 = vmatprep.subr.mxu0 %v490
    %717 = vmatpush2.msra.mxu0 %v489
    %718 = vmatprep.subr.mxu0 %v484
    %719 = vmatpush2.msra.mxu0 %v483
    %720 = vmatprep.subr.mxu0 %v478
    %721 = vmatpush2.msra.mxu0 %v477
    %722 = vmatprep.subr.mxu0 %v472
    %723 = vmatpush2.msra.mxu0 %v471
    %724 = vmatprep.subr.mxu0 %v466
    %725 = vmatpush2.msra.mxu0 %v465
    %726 = vmatprep.mubr.f32.mxu0 %v362
    %727 = vmatmul.mubr.f32.gmra.mxu0 %v361
    %v728 = vpop.f32.mrf.mxu0
    %v729 = vadd.f32 %v572, %v728
    %v730 = vpop.f32.mrf.mxu0
    %v731 = vadd.f32 %v576, %v730
    %732 = vdwg.mxu0
    %733 = vmatprep.subr.mxu0 %v462
    %734 = vmatpush1.msra.mxu0 %v461
    %735 = vmatprep.subr.mxu0 %v456
    %736 = vmatpush1.msra.mxu0 %v455
    %737 = vmatprep.subr.mxu0 %v450
    %738 = vmatpush1.msra.mxu0 %v449
    %739 = vmatprep.subr.mxu0 %v444
    %740 = vmatpush1.msra.mxu0 %v443
    %741 = vmatprep.subr.mxu0 %v438
    %742 = vmatpush1.msra.mxu0 %v437
    %743 = vmatprep.subr.mxu0 %v432
    %744 = vmatpush1.msra.mxu0 %v431
    %745 = vmatprep.subr.mxu0 %v426
    %746 = vmatpush1.msra.mxu0 %v425
    %747 = vmatprep.subr.mxu0 %v420
    %748 = vmatpush1.msra.mxu0 %v419
    %749 = vmatprep.subr.mxu0 %v414
    %750 = vmatpush1.msra.mxu0 %v413
    %751 = vmatprep.subr.mxu0 %v408
    %752 = vmatpush1.msra.mxu0 %v407
    %753 = vmatprep.subr.mxu0 %v402
    %754 = vmatpush1.msra.mxu0 %v401
    %755 = vmatprep.subr.mxu0 %v396
    %756 = vmatpush1.msra.mxu0 %v395
    %757 = vmatprep.subr.mxu0 %v390
    %758 = vmatpush1.msra.mxu0 %v389
    %759 = vmatprep.subr.mxu0 %v384
    %760 = vmatpush1.msra.mxu0 %v383
    %761 = vmatprep.subr.mxu0 %v378
    %762 = vmatpush1.msra.mxu0 %v377
    %763 = vmatprep.subr.mxu0 %v372
    %764 = vmatpush1.msra.mxu0 %v371
    %765 = vmatprep.subr.mxu0 %v558
    %766 = vmatpush2.msra.mxu0 %v557
    %767 = vmatprep.subr.mxu0 %v552
    %768 = vmatpush2.msra.mxu0 %v551
    %769 = vmatprep.subr.mxu0 %v546
    %770 = vmatpush2.msra.mxu0 %v545
    %771 = vmatprep.subr.mxu0 %v540
    %772 = vmatpush2.msra.mxu0 %v539
    %773 = vmatprep.subr.mxu0 %v534
    %774 = vmatpush2.msra.mxu0 %v533
    %775 = vmatprep.subr.mxu0 %v528
    %776 = vmatpush2.msra.mxu0 %v527
    %777 = vmatprep.subr.mxu0 %v522
    %778 = vmatpush2.msra.mxu0 %v521
    %779 = vmatprep.subr.mxu0 %v516
    %780 = vmatpush2.msra.mxu0 %v515
    %781 = vmatprep.subr.mxu0 %v510
    %782 = vmatpush2.msra.mxu0 %v509
    %783 = vmatprep.subr.mxu0 %v504
    %784 = vmatpush2.msra.mxu0 %v503
    %785 = vmatprep.subr.mxu0 %v498
    %786 = vmatpush2.msra.mxu0 %v497
    %787 = vmatprep.subr.mxu0 %v492
    %788 = vmatpush2.msra.mxu0 %v491
    %789 = vmatprep.subr.mxu0 %v486
    %790 = vmatpush2.msra.mxu0 %v485
    %791 = vmatprep.subr.mxu0 %v480
    %792 = vmatpush2.msra.mxu0 %v479
    %793 = vmatprep.subr.mxu0 %v474
    %794 = vmatpush2.msra.mxu0 %v473
    %795 = vmatprep.subr.mxu0 %v468
    %796 = vmatpush2.msra.mxu0 %v467
    %797 = vmatprep.mubr.f32.mxu0 %v362
    %798 = vmatmul.mubr.f32.gmra.mxu0 %v361
    %v799 = vpop.f32.mrf.mxu0
    %v800 = vadd.f32 %v580, %v799
    %v801 = vpop.f32.mrf.mxu0
    %v802 = vadd.f32 %v584, %v801
    %803 = vdwg.mxu0
    %v810 = vcombine.low %v658, %v660
    %v811 = vcombine.low %v729, %v731
    %v813 = vunpack.c.l.s4 1983009808
    %v814 = vunpack.c.0.s8 %v813
    %v815 = vlaneseq
    %v816 = vshrl.u32 %v815, 7
    %v817 = vsub.s32 %v814, %v816
    %v818 = vrot.slane %v810, %v817
    %v820 = vunpack.c.l.s4 1983009808
    %v821 = vunpack.c.0.s8 %v820
    %v822 = vlaneseq
    %v823 = vshrl.u32 %v822, 7
    %v824 = vsub.s32 %v821, %v823
    %v825 = vrot.slane %v811, %v824
    %v826 = vcombine.low %v818, %v825
    %v827 = vcombine.low %v800, %v802
    %v829 = vunpack.c.l.s4 1983009808
    %v830 = vunpack.c.0.s8 %v829
    %v831 = vlaneseq
    %v832 = vshrl.u32 %v831, 7
    %v833 = vsub.s32 %v830, %v832
    %v834 = vrot.slane %v827, %v833
    %837 = vst [vmem:[#allocation12] sm:$0xff] %v826
    %838 = vst [vmem:[#allocation12 + $0x8] sm:$0xf] %v834
    // Predicated region
    $region54: #{tpu_custom_call.1} parent=1 // pred_check
      _
    $region55: #{tpu_custom_call.1} parent=1 // pred_check_branch
      %840 = sbr.rel (0) target = $region57
    $region56: #{tpu_custom_call.1} parent=1 // pred_region
      %s842 = ssub.s32 192, 192
      %843 = vsyncadd [#allocation6], %s842
      %s845 = sshll.u32 [#allocation12], 4
      %s846 = int_to_ptr.vmem [resolvable:$true] %s845
      %848 = dma.vmem_to_hbm [thread:$0]  %s846, 192, %s9, [#allocation6]
    $region57: #{tpu_custom_call.1} parent=1 // pred_fallthru
      _
    // Predicated region
    $region58: #{tpu_custom_call.1} parent=1 // pred_check
      _
    $region59: #{tpu_custom_call.1} parent=1 // pred_check_branch
      %850 = sbr.rel (0) target = $region61
    $region60: #{tpu_custom_call.1} parent=1 // pred_region
      %851 = dma.done [#allocation6], 192
    $region61: #{tpu_custom_call.1} parent=1 // pred_fallthru
      _
    %852 = vsyncpa [#allocation5], 1
    %853 = vsyncpa [#allocation8], 1
    %854 = vsyncpa [#allocation11], 1
    %855 = vsyncpa [#allocation6], 1
  %856 = vsyncmov [#allocation3]
  %s857 = vpop.sfrf %856
  %p858 = scmp.eq.s32.totalorder %s857, 0
  %p859 = pneg %p858
  %861 = shalt.err (%p859)

</llo_original>
